<compile_context>
chip_gen: v7x
topology: tpu7x:2x2x1
jax: 0.10.0
libtpu: 0.0.40
codegen_flags: <defaults>
</compile_context>

<pallas_src>
import jax
import jax.numpy as jnp
from jax.experimental import pallas as pl
from jax.experimental.pallas import tpu as pltpu

_LANES = 128
# Single whole-array block (no grid) while the total working set
# (2 inputs + aliased output) stays far under the scoped-VMEM default on every
# generation (v7x: 32 MiB scoped / 64 MiB physical).  Above this, use the grid.
_SINGLE_BLOCK_TOTAL_BYTES = 12 * 1024 * 1024
# Row-blocked fallback tile: (2048, 128) f32 = 1 MiB per array; double-buffered
# across 3 arrays ~= 6 MiB -> VMEM-safe on v5e/v6e/v7x.
_GRID_BLOCK_ROWS = 2048


def _add_kernel(a_ref, b_ref, o_ref):
    o_ref[...] = a_ref[...] + b_ref[...]


def _cost(total, itemsize):
    return pl.CostEstimate(
        flops=total, transcendentals=0, bytes_accessed=3 * total * itemsize
    )


def _add_single_block(a, b):
    """Whole array as one VMEM block: one DMA in, one VPU burst, one DMA out."""
    total = a.size
    itemsize = jnp.dtype(a.dtype).itemsize
    return pl.pallas_call(
        _add_kernel,
        out_shape=jax.ShapeDtypeStruct(a.shape, a.dtype),
        in_specs=[
            pl.BlockSpec(memory_space=pltpu.MemorySpace.VMEM),
            pl.BlockSpec(memory_space=pltpu.MemorySpace.VMEM),
        ],
        out_specs=pl.BlockSpec(memory_space=pltpu.MemorySpace.VMEM),
        input_output_aliases={0: 0},          # output reuses x221's buffer
        cost_estimate=_cost(total, itemsize),
    )(a, b)


def _add_gridded(a2, b2):
    """Row-blocked fallback for large lane-dense (rows, 128) slabs."""
    rows, lanes = a2.shape
    total = a2.size
    itemsize = jnp.dtype(a2.dtype).itemsize
    block_rows = min(_GRID_BLOCK_ROWS, rows)
    spec = pl.BlockSpec((block_rows, lanes), lambda i: (i, 0))
    return pl.pallas_call(
        _add_kernel,
        out_shape=jax.ShapeDtypeStruct((rows, lanes), a2.dtype),
        grid=(pl.cdiv(rows, block_rows),),
        in_specs=[spec, spec],
        out_specs=spec,
        input_output_aliases={0: 0},
        cost_estimate=_cost(total, itemsize),
        compiler_params=pltpu.CompilerParams(
            dimension_semantics=("parallel",)  # v7x: shard rows across 2 TCs
        ),
    )(a2, b2)


def pallas_add(x221: jax.Array, x211: jax.Array) -> jax.Array:
    assert x221.shape == x211.shape and x221.dtype == x211.dtype
    orig_shape = x221.shape
    total = x221.size
    itemsize = jnp.dtype(x221.dtype).itemsize

    # Contiguous row-major flatten -> free layout bitcast (no data movement).
    a = x221.reshape(-1)
    b = x211.reshape(-1)

    if total % _LANES == 0:
        rows = total // _LANES
        a2 = a.reshape(rows, _LANES)  # lane-dense: full vregs, unmasked stores
        b2 = b.reshape(rows, _LANES)
        if 3 * total * itemsize <= _SINGLE_BLOCK_TOTAL_BYTES:
            out2 = _add_single_block(a2, b2)
        else:
            out2 = _add_gridded(a2, b2)
        return out2.reshape(orig_shape)

    # Ragged total: single whole-array 1-D block.  No padded full-tensor
    # copies and no output slice; lane-sparse layout but still one pass.
    # TODO(synk): if this path ever becomes hot, handle the tail in-kernel
    # with a masked pltpu.store instead.
    out = _add_single_block(a, b)
    return out.reshape(orig_shape)


# Donate the first argument at the jit boundary so input_output_aliases={0: 0}
# can reuse its HBM buffer end-to-end (no defensive copy, no extra allocation).
pallas_add_jit = jax.jit(pallas_add, donate_argnums=(0,))


if __name__ == "__main__":
    key = jax.random.PRNGKey(0)
    k1, k2 = jax.random.split(key)
    # Shapes taken directly from the module's forward: [1, 768, 7, 7]
    # (37,632 f32 elements -> exactly 294 x 128 lane-dense rows, no padding).
    x221 = jax.random.normal(k1, (1, 768, 7, 7), dtype=jnp.float32)
    x211 = jax.random.normal(k2, (1, 768, 7, 7), dtype=jnp.float32)

    # Compute the reference BEFORE the call: x221's buffer is donated.
    ref = x221 + x211

    out = pallas_add_jit(x221, x211)
    jax.block_until_ready(out)

    assert out.shape == (1, 768, 7, 7)
    assert out.dtype == jnp.float32
    assert jnp.allclose(out, ref, atol=1e-6, rtol=1e-6)

    print("KERNEL_OK")
</pallas_src>

<mosaic_0001>
module attributes {stable_mosaic.version = 11 : i64} {
  func.func @_add_kernel(%arg0: memref<294x128xf32, #tpu.memory_space<vmem>>, %arg1: memref<294x128xf32, #tpu.memory_space<vmem>>, %arg2: memref<294x128xf32, #tpu.memory_space<vmem>>) attributes {dimension_semantics = [], scalar_prefetch = 0 : i64, scratch_operands = 0 : i64, tpu.core_type = #tpu.core_type<tc>} {
    %c0 = arith.constant 0 : index
    %c0_0 = arith.constant 0 : index
    %0 = vector.load %arg0[%c0, %c0_0] : memref<294x128xf32, #tpu.memory_space<vmem>>, vector<294x128xf32>
    %c0_1 = arith.constant 0 : index
    %c0_2 = arith.constant 0 : index
    %1 = vector.load %arg1[%c0_1, %c0_2] : memref<294x128xf32, #tpu.memory_space<vmem>>, vector<294x128xf32>
    %2 = arith.addf %0, %1 : vector<294x128xf32>
    %c0_3 = arith.constant 0 : index
    %c0_4 = arith.constant 0 : index
    %3 = vector.load %arg2[%c0_3, %c0_4] : memref<294x128xf32, #tpu.memory_space<vmem>>, vector<294x128xf32>
    tpu.vector_store %arg2[%c0_3, %c0_4], %2 {strides = array<i32>} : memref<294x128xf32, #tpu.memory_space<vmem>>, vector<294x128xf32>,
    return
  }
}

</mosaic_0001>

<llo_original>
// kernel: pallas_add.1
$region0: #{pallas_add.1}
  #allocation0 [shape = 'u32[]', space=smem, size = 0x4, offset = 0x4, fixed_abs, tag = 'smem constant byte address 0x4 - core index']
  #allocation1 [shape = 'u32[144,128]{1,0:T(1,128)}', space=vmem, size = 0x12000, scoped, tag = 'internal scratch']
  %s0 = inlined_call_operand.vmem [shape: f32[294,128], index: 0, kind: input, shape index: {}, may-alias: {0,2}]
  %s1 = inlined_call_operand.vmem [shape: f32[294,128], index: 1, kind: input, shape index: {}]
  %s2 = inlined_call_operand.vmem [shape: f32[294,128], index: 2, kind: output, shape index: {}, may-alias: {0,2}]
  %s3 = sld [smem:[#allocation0]]
  $region18: #{pallas_add.1} parent=0
    _
  %s5 = ssub.s32 1, %s3
  %s6 = scalar_select 0, %s5, %s3
  // Predicated region
  $region2: #{pallas_add.1} parent=0 // pred_check
    _
  $region3: #{pallas_add.1} parent=0 // pred_check_branch
    %8 = sbr.rel (0) target = $region5
  $region4: #{pallas_add.1} parent=0 // pred_region
    _
  $region5: #{pallas_add.1} parent=0 // pred_fallthru
    _
  // Predicated region
  $region6: #{pallas_add.1} parent=0 // pred_check
    _
  $region7: #{pallas_add.1} parent=0 // pred_check_branch
    %10 = sbr.rel (0) target = $region9
  $region8: #{pallas_add.1} parent=0 // pred_region
    _
  $region9: #{pallas_add.1} parent=0 // pred_fallthru
    _
  %v11 = vld [vmem:[%s0] sm:$0xff]
  %v12 = vld [vmem:[%s0 + $0x8] sm:$0xff]
  %v13 = vld [vmem:[%s0 + $0x10] sm:$0xff]
  %v14 = vld [vmem:[%s0 + $0x18] sm:$0xff]
  %v15 = vld [vmem:[%s0 + $0x20] sm:$0xff]
  %v16 = vld [vmem:[%s0 + $0x28] sm:$0xff]
  %v17 = vld [vmem:[%s0 + $0x30] sm:$0xff]
  %v18 = vld [vmem:[%s0 + $0x38] sm:$0xff]
  %v19 = vld [vmem:[%s0 + $0x40] sm:$0xff]
  %v20 = vld [vmem:[%s0 + $0x48] sm:$0xff]
  %v21 = vld [vmem:[%s0 + $0x50] sm:$0xff]
  %v22 = vld [vmem:[%s0 + $0x58] sm:$0xff]
  %v23 = vld [vmem:[%s0 + $0x60] sm:$0xff]
  %v24 = vld [vmem:[%s0 + $0x68] sm:$0xff]
  %v25 = vld [vmem:[%s0 + $0x70] sm:$0xff]
  %v26 = vld [vmem:[%s0 + $0x78] sm:$0xff]
  %v27 = vld [vmem:[%s0 + $0x80] sm:$0xff]
  %v28 = vld [vmem:[%s0 + $0x88] sm:$0xff]
  %v29 = vld [vmem:[%s0 + $0x90] sm:$0xff]
  %v30 = vld [vmem:[%s0 + $0x98] sm:$0xff]
  %v31 = vld [vmem:[%s0 + $0xa0] sm:$0xff]
  %v32 = vld [vmem:[%s0 + $0xa8] sm:$0xff]
  %v33 = vld [vmem:[%s0 + $0xb0] sm:$0xff]
  %v34 = vld [vmem:[%s0 + $0xb8] sm:$0xff]
  %v35 = vld [vmem:[%s0 + $0xc0] sm:$0xff]
  %v36 = vld [vmem:[%s0 + $0xc8] sm:$0xff]
  %v37 = vld [vmem:[%s0 + $0xd0] sm:$0xff]
  %v38 = vld [vmem:[%s0 + $0xd8] sm:$0xff]
  %v39 = vld [vmem:[%s0 + $0xe0] sm:$0xff]
  %v40 = vld [vmem:[%s0 + $0xe8] sm:$0xff]
  %v41 = vld [vmem:[%s0 + $0xf0] sm:$0xff]
  %v42 = vld [vmem:[%s0 + $0xf8] sm:$0xff]
  %v43 = vld [vmem:[%s0 + $0x100] sm:$0xff]
  %v44 = vld [vmem:[%s0 + $0x108] sm:$0xff]
  %v45 = vld [vmem:[%s0 + $0x110] sm:$0xff]
  %v46 = vld [vmem:[%s0 + $0x118] sm:$0xff]
  %v47 = vld [vmem:[%s0 + $0x120] sm:$0x3f]
  %v48 = vld [vmem:[%s1] sm:$0xff]
  %v49 = vld [vmem:[%s1 + $0x8] sm:$0xff]
  %v50 = vld [vmem:[%s1 + $0x10] sm:$0xff]
  %v51 = vld [vmem:[%s1 + $0x18] sm:$0xff]
  %v52 = vld [vmem:[%s1 + $0x20] sm:$0xff]
  %v53 = vld [vmem:[%s1 + $0x28] sm:$0xff]
  %v54 = vld [vmem:[%s1 + $0x30] sm:$0xff]
  %v55 = vld [vmem:[%s1 + $0x38] sm:$0xff]
  %v56 = vld [vmem:[%s1 + $0x40] sm:$0xff]
  %v57 = vld [vmem:[%s1 + $0x48] sm:$0xff]
  %v58 = vld [vmem:[%s1 + $0x50] sm:$0xff]
  %v59 = vld [vmem:[%s1 + $0x58] sm:$0xff]
  %v60 = vld [vmem:[%s1 + $0x60] sm:$0xff]
  %v61 = vld [vmem:[%s1 + $0x68] sm:$0xff]
  %v62 = vld [vmem:[%s1 + $0x70] sm:$0xff]
  %v63 = vld [vmem:[%s1 + $0x78] sm:$0xff]
  %v64 = vld [vmem:[%s1 + $0x80] sm:$0xff]
  %v65 = vld [vmem:[%s1 + $0x88] sm:$0xff]
  %v66 = vld [vmem:[%s1 + $0x90] sm:$0xff]
  %v67 = vld [vmem:[%s1 + $0x98] sm:$0xff]
  %v68 = vld [vmem:[%s1 + $0xa0] sm:$0xff]
  %v69 = vld [vmem:[%s1 + $0xa8] sm:$0xff]
  %v70 = vld [vmem:[%s1 + $0xb0] sm:$0xff]
  %v71 = vld [vmem:[%s1 + $0xb8] sm:$0xff]
  %v72 = vld [vmem:[%s1 + $0xc0] sm:$0xff]
  %v73 = vld [vmem:[%s1 + $0xc8] sm:$0xff]
  %v74 = vld [vmem:[%s1 + $0xd0] sm:$0xff]
  %v75 = vld [vmem:[%s1 + $0xd8] sm:$0xff]
  %v76 = vld [vmem:[%s1 + $0xe0] sm:$0xff]
  %v77 = vld [vmem:[%s1 + $0xe8] sm:$0xff]
  %v78 = vld [vmem:[%s1 + $0xf0] sm:$0xff]
  %v79 = vld [vmem:[%s1 + $0xf8] sm:$0xff]
  %v80 = vld [vmem:[%s1 + $0x100] sm:$0xff]
  %v81 = vld [vmem:[%s1 + $0x108] sm:$0xff]
  %v82 = vld [vmem:[%s1 + $0x110] sm:$0xff]
  %v83 = vld [vmem:[%s1 + $0x118] sm:$0xff]
  %v84 = vld [vmem:[%s1 + $0x120] sm:$0x3f]
  %v85 = vadd.f32 %v11, %v48
  %v86 = vadd.f32 %v12, %v49
  %v87 = vadd.f32 %v13, %v50
  %v88 = vadd.f32 %v14, %v51
  %v89 = vadd.f32 %v15, %v52
  %v90 = vadd.f32 %v16, %v53
  %v91 = vadd.f32 %v17, %v54
  %v92 = vadd.f32 %v18, %v55
  %v93 = vadd.f32 %v19, %v56
  %v94 = vadd.f32 %v20, %v57
  %v95 = vadd.f32 %v21, %v58
  %v96 = vadd.f32 %v22, %v59
  %v97 = vadd.f32 %v23, %v60
  %v98 = vadd.f32 %v24, %v61
  %v99 = vadd.f32 %v25, %v62
  %v100 = vadd.f32 %v26, %v63
  %v101 = vadd.f32 %v27, %v64
  %v102 = vadd.f32 %v28, %v65
  %v103 = vadd.f32 %v29, %v66
  %v104 = vadd.f32 %v30, %v67
  %v105 = vadd.f32 %v31, %v68
  %v106 = vadd.f32 %v32, %v69
  %v107 = vadd.f32 %v33, %v70
  %v108 = vadd.f32 %v34, %v71
  %v109 = vadd.f32 %v35, %v72
  %v110 = vadd.f32 %v36, %v73
  %v111 = vadd.f32 %v37, %v74
  %v112 = vadd.f32 %v38, %v75
  %v113 = vadd.f32 %v39, %v76
  %v114 = vadd.f32 %v40, %v77
  %v115 = vadd.f32 %v41, %v78
  %v116 = vadd.f32 %v42, %v79
  %v117 = vadd.f32 %v43, %v80
  %v118 = vadd.f32 %v44, %v81
  %v119 = vadd.f32 %v45, %v82
  %v120 = vadd.f32 %v46, %v83
  %v121 = vadd.f32 %v47, %v84
  %122 = vst [vmem:[%s2] sm:$0xff] %v85
  %123 = vst [vmem:[%s2 + $0x8] sm:$0xff] %v86
  %124 = vst [vmem:[%s2 + $0x10] sm:$0xff] %v87
  %125 = vst [vmem:[%s2 + $0x18] sm:$0xff] %v88
  %126 = vst [vmem:[%s2 + $0x20] sm:$0xff] %v89
  %127 = vst [vmem:[%s2 + $0x28] sm:$0xff] %v90
  %128 = vst [vmem:[%s2 + $0x30] sm:$0xff] %v91
  %129 = vst [vmem:[%s2 + $0x38] sm:$0xff] %v92
  %130 = vst [vmem:[%s2 + $0x40] sm:$0xff] %v93
  %131 = vst [vmem:[%s2 + $0x48] sm:$0xff] %v94
  %132 = vst [vmem:[%s2 + $0x50] sm:$0xff] %v95
  %133 = vst [vmem:[%s2 + $0x58] sm:$0xff] %v96
  %134 = vst [vmem:[%s2 + $0x60] sm:$0xff] %v97
  %135 = vst [vmem:[%s2 + $0x68] sm:$0xff] %v98
  %136 = vst [vmem:[%s2 + $0x70] sm:$0xff] %v99
  %137 = vst [vmem:[%s2 + $0x78] sm:$0xff] %v100
  %138 = vst [vmem:[%s2 + $0x80] sm:$0xff] %v101
  %139 = vst [vmem:[%s2 + $0x88] sm:$0xff] %v102
  %140 = vst [vmem:[%s2 + $0x90] sm:$0xff] %v103
  %141 = vst [vmem:[%s2 + $0x98] sm:$0xff] %v104
  %142 = vst [vmem:[%s2 + $0xa0] sm:$0xff] %v105
  %143 = vst [vmem:[%s2 + $0xa8] sm:$0xff] %v106
  %144 = vst [vmem:[%s2 + $0xb0] sm:$0xff] %v107
  %145 = vst [vmem:[%s2 + $0xb8] sm:$0xff] %v108
  %146 = vst [vmem:[%s2 + $0xc0] sm:$0xff] %v109
  %147 = vst [vmem:[%s2 + $0xc8] sm:$0xff] %v110
  %148 = vst [vmem:[%s2 + $0xd0] sm:$0xff] %v111
  %149 = vst [vmem:[%s2 + $0xd8] sm:$0xff] %v112
  %150 = vst [vmem:[%s2 + $0xe0] sm:$0xff] %v113
  %151 = vst [vmem:[%s2 + $0xe8] sm:$0xff] %v114
  %152 = vst [vmem:[%s2 + $0xf0] sm:$0xff] %v115
  %153 = vst [vmem:[%s2 + $0xf8] sm:$0xff] %v116
  %154 = vst [vmem:[%s2 + $0x100] sm:$0xff] %v117
  %155 = vst [vmem:[%s2 + $0x108] sm:$0xff] %v118
  %156 = vst [vmem:[%s2 + $0x110] sm:$0xff] %v119
  %157 = vst [vmem:[%s2 + $0x118] sm:$0xff] %v120
  %158 = vst [vmem:[%s2 + $0x120] sm:$0x3f] %v121
  // Predicated region
  $region10: #{pallas_add.1} parent=0 // pred_check
    _
  $region11: #{pallas_add.1} parent=0 // pred_check_branch
    %160 = sbr.rel (0) target = $region13
  $region12: #{pallas_add.1} parent=0 // pred_region
    _
  $region13: #{pallas_add.1} parent=0 // pred_fallthru
    _
  // Predicated region
  $region14: #{pallas_add.1} parent=0 // pred_check
    _
  $region15: #{pallas_add.1} parent=0 // pred_check_branch
    %162 = sbr.rel (0) target = $region17
  $region16: #{pallas_add.1} parent=0 // pred_region
    _
  $region17: #{pallas_add.1} parent=0 // pred_fallthru
    _

</llo_original>
